<compile_context>
chip_gen: v5e
topology: v5e:2x2
jax: 0.10.0
libtpu: 0.0.40
codegen_flags: <defaults>
</compile_context>

<pallas_src>
import jax
import jax.numpy as jnp
from jax.experimental import pallas as pl
from jax.experimental.pallas import tpu as pltpu


def _h_swish_kernel(x_ref, o_ref):
    # Deliberately left as a plain 5-op VALU body: this kernel is HBM/DMA
    # bound on v5e/v6e/v7x, so VALU micro-optimizations are invisible.
    xf = x_ref[...].astype(jnp.float32)
    r6 = jnp.clip(xf + 3.0, 0.0, 6.0)
    o_ref[...] = (xf * r6 * (1.0 / 6.0)).astype(o_ref.dtype)


def _cdiv(a, b):
    return -(-a // b)


def _round_down(a, b):
    return (a // b) * b


# Lane widths to try for the flattened slab (widest first, multiples of 128).
_LANE_CANDIDATES = (8192, 4096, 2048, 1024, 512, 256, 128)
# ~6 MiB per block: 2 arrays x 2 buffers x 6 MiB = 24 MiB live, comfortably
# under the 32 MiB scoped limit (leaves headroom for Mosaic internal scratch
# on v7x, which has only 64 MiB physical VMEM per TensorCore).
_TARGET_BLOCK_BYTES = 6 * 1024 * 1024
_VMEM_LIMIT_BYTES = 32 * 1024 * 1024
# Pipeline steady state: >= 8 grid steps when the tensor allows it
# (>= 4 overlapped blocks per v7x TensorCore).
_MIN_GRID_STEPS = 8
# Below this grid size, nudge the step count to a multiple of 2 so v7x's two
# TensorCores get balanced work; above it a 1-block imbalance is negligible.
_EVEN_GRID_MAX = 64


def _choose_tile_rows(rows, lane_w, itemsize, sub):
    """Pick the row-tile (multiple of `sub`) for a (rows, lane_w) slab."""
    if rows <= sub:
        return rows  # full-extent sublane dim (allowed by tiling rules)

    R = _cdiv(rows, sub)                       # rows measured in sub-row units
    bytes_per_unit = sub * lane_w * itemsize
    t_cap = max(1, _TARGET_BLOCK_BYTES // bytes_per_unit)
    min_steps = min(_MIN_GRID_STEPS, R)
    # Largest tile (in sub-units) that still yields >= min_steps grid steps.
    t = max(1, min(t_cap, R // min_steps))
    grid = _cdiv(R, t)
    # Small odd grids leave one v7x TensorCore with an extra block: nudge even.
    if grid % 2 == 1 and 2 <= grid < _EVEN_GRID_MAX and grid < R:
        for t2 in range(t - 1, 0, -1):
            if _cdiv(R, t2) % 2 == 0:
                t = t2
                break
    return t * sub


def _h_swish_slab(x_flat, n, lane_w, dtype, itemsize, sub, inplace):
    """Run the Pallas kernel over a flat, lane_w-divisible chunk of n elems."""
    rows = n // lane_w
    x2d = x_flat.reshape(rows, lane_w)

    tile_rows = _choose_tile_rows(rows, lane_w, itemsize, sub)
    grid = pl.cdiv(rows, tile_rows)  # ragged last block is masked by Pallas

    cost = pl.CostEstimate(
        flops=4 * n,
        transcendentals=0,
        bytes_accessed=2 * n * itemsize,
    )

    return pl.pallas_call(
        _h_swish_kernel,
        out_shape=jax.ShapeDtypeStruct((rows, lane_w), dtype),
        grid_spec=pltpu.PrefetchScalarGridSpec(
            num_scalar_prefetch=0,
            grid=(grid,),
            in_specs=[pl.BlockSpec((tile_rows, lane_w), lambda i: (i, 0))],
            out_specs=pl.BlockSpec((tile_rows, lane_w), lambda i: (i, 0)),
        ),
        compiler_params=pltpu.CompilerParams(
            dimension_semantics=("parallel",),
            vmem_limit_bytes=_VMEM_LIMIT_BYTES,
        ),
        cost_estimate=cost,
        input_output_aliases=({0: 0} if inplace else {}),
    )(x2d)


def _h_swish_jnp(x):
    return (x * jnp.clip(x + 3.0, 0.0, 6.0) * (1.0 / 6.0)).astype(x.dtype)


def h_swish(x: jax.Array, *, inplace: bool = False) -> jax.Array:
    """Hard-swish: x * relu6(x + 3) / 6, elementwise.

    Any shape, float dtype. `inplace=True` aliases the output onto the input
    buffer (only effective if the caller donates `x`).
    """
    if not jnp.issubdtype(x.dtype, jnp.floating):
        raise TypeError(f"h_swish expects a floating dtype, got {x.dtype}")

    orig_shape = x.shape
    dtype = x.dtype
    itemsize = jnp.dtype(dtype).itemsize
    # Minimum sublane granularity per dtype packing (f32:8, bf16/f16:16, fp8:32).
    sub = {4: 8, 2: 16, 1: 32}.get(itemsize, 8)

    total = x.size
    if total == 0:
        return x

    x_flat = x.reshape(-1)  # contiguous flatten: bitcast, no HBM copy

    # Pick the widest lane dim that divides the element count exactly
    # (the common case for NCHW activations).
    lane_w = None
    for cand in _LANE_CANDIDATES:
        if total % cand == 0:
            lane_w = cand
            break

    if lane_w is not None:
        out2d = _h_swish_slab(x_flat, total, lane_w, dtype, itemsize, sub, inplace)
        return out2d.reshape(orig_shape)

    # Ragged case (numel % 128 != 0): run the kernel on the lane-divisible
    # prefix and compute the <128-element tail with plain jnp — avoids the
    # pad + slice path that triples HBM traffic.
    prefix = _round_down(total, 128)
    if prefix == 0:
        return _h_swish_jnp(x_flat).reshape(orig_shape)
    lane_w = next(c for c in _LANE_CANDIDATES if prefix % c == 0)
    head = _h_swish_slab(
        x_flat[:prefix], prefix, lane_w, dtype, itemsize, sub, False
    ).reshape(-1)
    tail = _h_swish_jnp(x_flat[prefix:])
    return jnp.concatenate([head, tail]).reshape(orig_shape)


def _ref(x):
    xf = x.astype(jnp.float32)
    return (xf * jnp.clip(xf + 3.0, 0.0, 6.0) / 6.0).astype(x.dtype)


if __name__ == "__main__":
    key = jax.random.PRNGKey(0)
    # NCHW input, same convention as the PyTorch module.
    x = jax.random.normal(key, (2, 4, 16, 16), dtype=jnp.float32) * 4.0

    y = h_swish(x)
    jax.block_until_ready(y)
    assert y.shape == x.shape and y.dtype == x.dtype
    assert jnp.allclose(y, _ref(x), atol=1e-6), "mismatch vs reference"

    # (a) non-128-divisible size (prefix + jnp-tail split path),
    # (b) multi-block grid with a ragged, masked final row block,
    # (c) larger tensor exercising the >= 8-step pipeline path.
    for shape in [(3, 5, 7, 9), (2, 3, 40, 128), (2, 64, 64, 64)]:
        xi = jax.random.normal(jax.random.PRNGKey(1), shape, dtype=jnp.float32) * 4.0
        yi = h_swish(xi)
        jax.block_until_ready(yi)
        assert yi.shape == xi.shape and yi.dtype == xi.dtype
        assert jnp.allclose(yi, _ref(xi), atol=1e-6), f"mismatch for {shape}"

    # bf16 input: kernel computes internally in f32 and casts back at the store.
    xb = (jax.random.normal(jax.random.PRNGKey(2), (2, 4, 16, 16)) * 4.0).astype(jnp.bfloat16)
    yb = h_swish(xb)
    jax.block_until_ready(yb)
    assert yb.shape == xb.shape and yb.dtype == xb.dtype
    assert jnp.allclose(yb.astype(jnp.float32), _ref(xb).astype(jnp.float32), atol=2e-2)

    print("KERNEL_OK")
</pallas_src>

<mosaic_0001>
module attributes {stable_mosaic.version = 11 : i64} {
  func.func @_h_swish_kernel(%arg0: i32, %arg1: memref<1x2048xf32, #tpu.memory_space<vmem>>, %arg2: memref<1x2048xf32, #tpu.memory_space<vmem>>) attributes {dimension_semantics = [#tpu.dimension_semantics<parallel>], iteration_bounds = array<i64: 1>, scalar_prefetch = 0 : i64, scratch_operands = 0 : i64, tpu.core_type = #tpu.core_type<tc>, window_params = [{transform_indices = @transform_0, window_bounds = array<i64: 1, 2048>}, {transform_indices = @transform_1, window_bounds = array<i64: 1, 2048>}]} {
    %c0 = arith.constant 0 : index
    %c0_0 = arith.constant 0 : index
    %0 = vector.load %arg1[%c0, %c0_0] : memref<1x2048xf32, #tpu.memory_space<vmem>>, vector<1x2048xf32>
    %cst = arith.constant 3.000000e+00 : f32
    %1 = vector.broadcast %cst : f32 to vector<1x2048xf32>
    %2 = arith.addf %0, %1 : vector<1x2048xf32>
    %cst_1 = arith.constant 0.000000e+00 : f32
    %cst_2 = arith.constant 6.000000e+00 : f32
    %3 = vector.broadcast %cst_1 : f32 to vector<1x2048xf32>
    %4 = arith.maximumf %3, %2 : vector<1x2048xf32>
    %5 = vector.broadcast %cst_2 : f32 to vector<1x2048xf32>
    %6 = arith.minimumf %5, %4 : vector<1x2048xf32>
    %7 = arith.mulf %0, %6 : vector<1x2048xf32>
    %cst_3 = arith.constant 0.166666672 : f32
    %8 = vector.broadcast %cst_3 : f32 to vector<1x2048xf32>
    %9 = arith.mulf %7, %8 : vector<1x2048xf32>
    %c0_4 = arith.constant 0 : index
    %c0_5 = arith.constant 0 : index
    %10 = vector.load %arg2[%c0_4, %c0_5] : memref<1x2048xf32, #tpu.memory_space<vmem>>, vector<1x2048xf32>
    tpu.vector_store %arg2[%c0_4, %c0_5], %9 {strides = array<i32>} : memref<1x2048xf32, #tpu.memory_space<vmem>>, vector<1x2048xf32>,
    return
  }
  func.func @transform_0(%arg0: i32) -> (i32, i32) {
    %c0_i32 = arith.constant 0 : i32
    %c0_i32_0 = arith.constant 0 : i32
    return %arg0, %c0_i32 : i32, i32
  }
  func.func @transform_1(%arg0: i32) -> (i32, i32) {
    %c0_i32 = arith.constant 0 : i32
    %c0_i32_0 = arith.constant 0 : i32
    return %arg0, %c0_i32 : i32, i32
  }
}

</mosaic_0001>

<llo_original>
// kernel: tpu_custom_call.1
$region0: #{tpu_custom_call.1}
  #allocation0 [shape = 'u32[]', space=smem, size = 0x4, offset = 0x4, fixed_abs, tag = 'smem constant byte address 0x4 - core index']
  #allocation1 [shape = 'u32[72,128]{1,0:T(1,128)}', space=vmem, size = 0x9000, scoped, tag = 'internal scratch']
  %s0 = inlined_call_operand.hbm [shape: f32[1,2048], index: 0, kind: input, shape index: {}]
  %s1 = inlined_call_operand.hbm [shape: f32[1,2048], index: 1, kind: output, shape index: {}]
  %s2 = sld [smem:[#allocation0]]
  $region18: #{tpu_custom_call.1} parent=0
    _
  %s4 = ssub.s32 1, %s2
  %s5 = scalar_select 0, %s4, %s2
  $region1: #{tpu_custom_call.1} parent=0
    #allocation2 [shape = 'u8[8192]{0}', space=vmem, size = 0x2000, scoped, tag = 'input window, operand 0, single buffered']
    #allocation3 [shape = 's32[1]{0}', space=sflag, size = 0x4, scoped, tag = 'scoped memory for tpu_custom_call.1']
    #allocation4 [shape = 's32[1]{0}', space=sflag, size = 0x4, scoped, tag = 'scoped memory for tpu_custom_call.1']
    #allocation5 [shape = 'u8[8192]{0}', space=vmem, size = 0x2000, scoped, tag = 'output window, operand 0, single buffered']
    %6 = vsyncpa [#allocation3], 0
    %7 = vsyncpa [#allocation4], 0
    // Predicated region
    $region2: #{tpu_custom_call.1} parent=1 // pred_check
      _
    $region3: #{tpu_custom_call.1} parent=1 // pred_check_branch
      %9 = sbr.rel (0) target = $region5
    $region4: #{tpu_custom_call.1} parent=1 // pred_region
      %11 = vsyncadd [#allocation3], 0
      %s13 = sshll.u32 %s0, 4
      %s14 = int_to_ptr.hbm [resolvable:$true] %s13
      %s15 = sshll.u32 [#allocation2], 4
      %s16 = int_to_ptr.vmem [resolvable:$true] %s15
      %18 = dma.hbm_to_vmem [thread:$0]  %s14, 256, %s16, [#allocation3]
    $region5: #{tpu_custom_call.1} parent=1 // pred_fallthru
      _
    // Predicated region
    $region6: #{tpu_custom_call.1} parent=1 // pred_check
      _
    $region7: #{tpu_custom_call.1} parent=1 // pred_check_branch
      %20 = sbr.rel (0) target = $region9
    $region8: #{tpu_custom_call.1} parent=1 // pred_region
      %22 = dma.done [#allocation3], 256
    $region9: #{tpu_custom_call.1} parent=1 // pred_fallthru
      _
    %v23 = vld [vmem:[#allocation2] sm:$0xff]
    %v24 = vld [vmem:[#allocation2 + $0x8] sm:$0xff]
    %v25 = vadd.f32 %v23, 3.0
    %v26 = vadd.f32 %v24, 3.0
    %v27 = vmax.f32 %v25, 0.0
    %v28 = vmax.f32 %v26, 0.0
    %v29 = vmin.f32 %v27, 6.0
    %v30 = vmin.f32 %v28, 6.0
    %v31 = vmul.f32 %v23, %v29
    %v32 = vmul.f32 %v24, %v30
    %v33 = vmul.f32 %v31, 0.16666667
    %v34 = vmul.f32 %v32, 0.16666667
    %35 = vst [vmem:[#allocation5] sm:$0xff] %v33
    %36 = vst [vmem:[#allocation5 + $0x8] sm:$0xff] %v34
    // Predicated region
    $region10: #{tpu_custom_call.1} parent=1 // pred_check
      _
    $region11: #{tpu_custom_call.1} parent=1 // pred_check_branch
      %38 = sbr.rel (0) target = $region13
    $region12: #{tpu_custom_call.1} parent=1 // pred_region
      %40 = vsyncadd [#allocation4], 0
      %s42 = sshll.u32 [#allocation5], 4
      %s43 = int_to_ptr.vmem [resolvable:$true] %s42
      %s44 = sshll.u32 %s1, 4
      %s45 = int_to_ptr.hbm [resolvable:$true] %s44
      %47 = dma.vmem_to_hbm [thread:$0]  %s43, 256, %s45, [#allocation4]
    $region13: #{tpu_custom_call.1} parent=1 // pred_fallthru
      _
    // Predicated region
    $region14: #{tpu_custom_call.1} parent=1 // pred_check
      _
    $region15: #{tpu_custom_call.1} parent=1 // pred_check_branch
      %49 = sbr.rel (0) target = $region17
    $region16: #{tpu_custom_call.1} parent=1 // pred_region
      %51 = dma.done [#allocation4], 256
    $region17: #{tpu_custom_call.1} parent=1 // pred_fallthru
      _
    %52 = vsyncpa [#allocation3], 1
    %53 = vsyncpa [#allocation4], 1

</llo_original>
